<compile_context>
chip_gen: v6e
topology: v6e:2x2x1
jax: 0.10.0
libtpu: 0.0.40
codegen_flags: <defaults>
</compile_context>

<pallas_src>
import functools

import jax
import jax.numpy as jnp
from jax.experimental import pallas as pl
from jax.experimental.pallas import tpu as pltpu


def _round_up(x, m):
    return (x + m - 1) // m * m


def _distmult_kernel(e1_ref, rel_ref, wt_ref, out_ref):
    # Elementwise score vector in f32 (VPU), downcast to bf16 for the MXU.
    h = (e1_ref[...] * rel_ref[...]).astype(jnp.bfloat16)
    # (B, Dp) @ (Dp, TE) -> (B, TE), f32 accumulation on the MXU (no RHS transpose).
    logits = jnp.dot(h, wt_ref[...], preferred_element_type=jnp.float32)
    # sigmoid(x) = 1 / (1 + exp(-x)); exp + approx reciprocal both go to the EUP.
    out_ref[...] = pl.reciprocal(1.0 + jnp.exp(-logits), approx=True).astype(
        out_ref.dtype)


def pack_entity_weight(emb_e_weight, *, te=512):
    """Init-time weight prep: pad D -> multiple of 256 and E -> multiple of TE,
    transpose to (Dp, Ep), cast to bf16. Zero padding contributes 0 to the dot."""
    E, D = emb_e_weight.shape
    Dp = _round_up(D, 256)
    te = _round_up(min(te, _round_up(E, 128)), 128)
    Ep = _round_up(E, te)
    wt = jnp.pad(emb_e_weight.T.astype(jnp.bfloat16), ((0, Dp - D), (0, Ep - E)))
    return wt, te


def distmult_pred(e1_emb, rel_emb, wt, te, num_entities):
    """e1_emb, rel_emb: (B, D) f32; wt: (Dp, Ep) bf16 packed weight -> (B, E) f32."""
    B, D = e1_emb.shape
    Dp, Ep = wt.shape
    Bp = _round_up(B, 8)

    e1p = jnp.pad(e1_emb.astype(jnp.float32), ((0, Bp - B), (0, Dp - D)))
    relp = jnp.pad(rel_emb.astype(jnp.float32), ((0, Bp - B), (0, Dp - D)))

    grid = (Ep // te,)

    # Explicit VMEM budget: double-buffered bf16 W tile + f32 out tile, resident
    # e1/rel blocks, 4x headroom for compiler scratch. Clamped to 48 MiB so a
    # v6e-sized tile choice can never exceed v7x's 64 MiB physical VMEM.
    tile_bytes = (2 * Dp * te * 2          # bf16 W tile, double-buffered
                  + 2 * Bp * te * 4        # f32 output tile, double-buffered
                  + 2 * 2 * Bp * Dp * 4)   # e1 / rel blocks
    vmem_limit = int(max(16 * 1024 * 1024, min(48 * 1024 * 1024, 4 * tile_bytes)))

    out = pl.pallas_call(
        _distmult_kernel,
        out_shape=jax.ShapeDtypeStruct((Bp, Ep), jnp.float32),
        grid_spec=pltpu.PrefetchScalarGridSpec(
            num_scalar_prefetch=0,
            grid=grid,
            in_specs=[
                pl.BlockSpec((Bp, Dp), lambda j: (0, 0)),   # e1 block (resident)
                pl.BlockSpec((Bp, Dp), lambda j: (0, 0)),   # rel block (resident)
                pl.BlockSpec((Dp, te), lambda j: (0, j)),   # W tile, streamed over E
            ],
            out_specs=pl.BlockSpec((Bp, te), lambda j: (0, j)),
        ),
        compiler_params=pltpu.CompilerParams(
            # E-tiles are independent -> v7x shards them across its 2 TensorCores.
            dimension_semantics=("parallel",),
            vmem_limit_bytes=vmem_limit,
        ),
    )(e1p, relp, wt)

    # Drop batch padding and the sigmoid(0)=0.5 columns of padded entities.
    return out[:B, :num_entities]


@functools.partial(jax.jit, static_argnames=("te",))
def distmult_forward(e1, rel, emb_e_weight, emb_rel_weight, *, te=512):
    """Full forward. e1, rel: int32 (B, 1) index tensors (as in the SACN driver)."""
    E = emb_e_weight.shape[0]
    # Embedding lookup + squeeze (plain-JAX glue, not the hot path).
    e1_emb = jnp.take(emb_e_weight, e1.reshape(-1), axis=0)      # (B, D)
    rel_emb = jnp.take(emb_rel_weight, rel.reshape(-1), axis=0)  # (B, D)
    # input_dropout = 0.0 -> identity (inference semantics).
    # For a production model, pack_entity_weight would be hoisted to model init.
    wt, te = pack_entity_weight(emb_e_weight, te=te)
    return distmult_pred(e1_emb, rel_emb, wt, te, E)


def _xavier_normal(key, shape):
    fan_out, fan_in = shape
    std = (2.0 / (fan_in + fan_out)) ** 0.5
    return std * jax.random.normal(key, shape, dtype=jnp.float32)


if __name__ == "__main__":
    # Small, module-consistent shapes: embedding_dim follows Config.embedding_dim = 200.
    num_entities = 32
    num_relations = 16
    embedding_dim = 200   # Config.embedding_dim
    batch = 8

    key = jax.random.PRNGKey(0)
    k_e, k_r, k_e1, k_rel = jax.random.split(key, 4)

    # Deterministic "xavier_normal_" init (module's init() overwrites padding row too).
    emb_e_weight = _xavier_normal(k_e, (num_entities, embedding_dim))
    emb_rel_weight = _xavier_normal(k_r, (num_relations, embedding_dim))

    e1 = jax.random.randint(k_e1, (batch, 1), 0, num_entities, dtype=jnp.int32)
    rel = jax.random.randint(k_rel, (batch, 1), 0, num_relations, dtype=jnp.int32)
    # X, A are unused by DistMult.forward -> omitted.

    pred = distmult_forward(e1, rel, emb_e_weight, emb_rel_weight)
    pred = jax.block_until_ready(pred)

    # Plain-JAX f32 reference (kernel uses bf16 weights + approx reciprocal,
    # so compare with a loose absolute tolerance on the [0, 1] outputs).
    e1_emb = jnp.take(emb_e_weight, e1.reshape(-1), axis=0)
    rel_emb = jnp.take(emb_rel_weight, rel.reshape(-1), axis=0)
    ref = jax.nn.sigmoid((e1_emb * rel_emb) @ emb_e_weight.T)

    assert pred.shape == (batch, num_entities)
    max_err = float(jnp.max(jnp.abs(pred - ref)))
    assert jnp.allclose(pred, ref, atol=3e-3, rtol=0.0), max_err

    print("KERNEL_OK")
</pallas_src>

<mosaic_0001>
module attributes {stable_mosaic.version = 11 : i64} {
  func.func @_distmult_kernel(%arg0: i32, %arg1: memref<8x256xf32, #tpu.memory_space<vmem>>, %arg2: memref<8x256xf32, #tpu.memory_space<vmem>>, %arg3: memref<256x128xbf16, #tpu.memory_space<vmem>>, %arg4: memref<8x128xf32, #tpu.memory_space<vmem>>) attributes {dimension_semantics = [#tpu.dimension_semantics<parallel>], iteration_bounds = array<i64: 1>, scalar_prefetch = 0 : i64, scratch_operands = 0 : i64, tpu.core_type = #tpu.core_type<tc>, window_params = [{pipeline_mode = #tpu.pipeline_mode<synchronous>, transform_indices = @transform_0, window_bounds = array<i64: 8, 256>}, {pipeline_mode = #tpu.pipeline_mode<synchronous>, transform_indices = @transform_1, window_bounds = array<i64: 8, 256>}, {transform_indices = @transform_2, window_bounds = array<i64: 256, 128>}, {transform_indices = @transform_3, window_bounds = array<i64: 8, 128>}]} {
    %c0 = arith.constant 0 : index
    %c0_0 = arith.constant 0 : index
    %0 = vector.load %arg1[%c0, %c0_0] : memref<8x256xf32, #tpu.memory_space<vmem>>, vector<8x256xf32>
    %c0_1 = arith.constant 0 : index
    %c0_2 = arith.constant 0 : index
    %1 = vector.load %arg2[%c0_1, %c0_2] : memref<8x256xf32, #tpu.memory_space<vmem>>, vector<8x256xf32>
    %2 = arith.mulf %0, %1 : vector<8x256xf32>
    %3 = arith.truncf %2 : vector<8x256xf32> to vector<8x256xbf16>
    %c0_3 = arith.constant 0 : index
    %c0_4 = arith.constant 0 : index
    %4 = vector.load %arg3[%c0_3, %c0_4] : memref<256x128xbf16, #tpu.memory_space<vmem>>, vector<256x128xbf16>
    %cst = arith.constant dense<0.000000e+00> : vector<8x128xf32>
    %5 = tpu.matmul %3, %4, %cst {dimension_numbers = #tpu.dot_dimension_numbers<[1], [0], [0], [1], [0, 0, 1, 1], [], []>} : vector<8x256xbf16>, vector<256x128xbf16>, vector<8x128xf32> -> vector<8x128xf32>
    %cst_5 = arith.constant 0.000000e+00 : f32
    %6 = vector.broadcast %cst_5 : f32 to vector<8x128xf32>
    %7 = arith.subf %6, %5 : vector<8x128xf32>
    %8 = math.exp %7 : vector<8x128xf32>
    %cst_6 = arith.constant 1.000000e+00 : f32
    %9 = vector.broadcast %cst_6 : f32 to vector<8x128xf32>
    %10 = arith.addf %9, %8 : vector<8x128xf32>
    %11 = tpu.reciprocal %10 {approx = true} : vector<8x128xf32> -> vector<8x128xf32>
    %c0_7 = arith.constant 0 : index
    %c0_8 = arith.constant 0 : index
    %12 = vector.load %arg4[%c0_7, %c0_8] : memref<8x128xf32, #tpu.memory_space<vmem>>, vector<8x128xf32>
    tpu.vector_store %arg4[%c0_7, %c0_8], %11 {strides = array<i32>} : memref<8x128xf32, #tpu.memory_space<vmem>>, vector<8x128xf32>,
    return
  }
  func.func @transform_0(%arg0: i32) -> (i32, i32) {
    %c0_i32 = arith.constant 0 : i32
    %c0_i32_0 = arith.constant 0 : i32
    %c0_i32_1 = arith.constant 0 : i32
    return %c0_i32, %c0_i32_0 : i32, i32
  }
  func.func @transform_1(%arg0: i32) -> (i32, i32) {
    %c0_i32 = arith.constant 0 : i32
    %c0_i32_0 = arith.constant 0 : i32
    %c0_i32_1 = arith.constant 0 : i32
    return %c0_i32, %c0_i32_0 : i32, i32
  }
  func.func @transform_2(%arg0: i32) -> (i32, i32) {
    %c0_i32 = arith.constant 0 : i32
    %c0_i32_0 = arith.constant 0 : i32
    return %c0_i32, %arg0 : i32, i32
  }
  func.func @transform_3(%arg0: i32) -> (i32, i32) {
    %c0_i32 = arith.constant 0 : i32
    %c0_i32_0 = arith.constant 0 : i32
    return %c0_i32, %arg0 : i32, i32
  }
}

</mosaic_0001>

<llo_original>
// kernel: distmult_forward.1
$region0: #{distmult_forward.1}
  #allocation0 [shape = 'u32[]', space=smem, size = 0x4, offset = 0x4, fixed_abs, tag = 'smem constant byte address 0x4 - core index']
  #allocation1 [shape = 'u32[144,128]{1,0:T(1,128)}', space=vmem, size = 0x12000, scoped, tag = 'internal scratch']
  %s0 = inlined_call_operand.vmem [shape: f32[8,256], index: 0, kind: input, shape index: {}]
  %s1 = inlined_call_operand.vmem [shape: f32[8,256], index: 1, kind: input, shape index: {}]
  %s2 = inlined_call_operand.vmem [shape: bf16[256,128], index: 2, kind: input, shape index: {}]
  %s3 = inlined_call_operand.hbm [shape: f32[8,128], index: 3, kind: output, shape index: {}]
  %s4 = sld [smem:[#allocation0]]
  $region22: #{distmult_forward.1} parent=0
    _
  %s6 = ssub.s32 1, %s4
  %s7 = scalar_select 0, %s6, %s4
  $region1: #{distmult_forward.1} parent=0
    #allocation2 [shape = 'u8[4096]{0}', space=vmem, size = 0x1000, scoped, tag = 'output window, operand 0, single buffered']
    #allocation3 [shape = 's32[1]{0}', space=sflag, size = 0x4, scoped, tag = 'scoped memory for distmult_forward.1']
    %8 = vsyncpa [#allocation3], 0
    // Predicated region
    $region2: #{distmult_forward.1} parent=1 // pred_check
      _
    $region3: #{distmult_forward.1} parent=1 // pred_check_branch
      %10 = sbr.rel (0) target = $region5
    $region4: #{distmult_forward.1} parent=1 // pred_region
      _
    $region5: #{distmult_forward.1} parent=1 // pred_fallthru
      _
    // Predicated region
    $region6: #{distmult_forward.1} parent=1 // pred_check
      _
    $region7: #{distmult_forward.1} parent=1 // pred_check_branch
      %12 = sbr.rel (0) target = $region9
    $region8: #{distmult_forward.1} parent=1 // pred_region
      _
    $region9: #{distmult_forward.1} parent=1 // pred_fallthru
      _
    // Predicated region
    $region10: #{distmult_forward.1} parent=1 // pred_check
      _
    $region11: #{distmult_forward.1} parent=1 // pred_check_branch
      %14 = sbr.rel (0) target = $region13
    $region12: #{distmult_forward.1} parent=1 // pred_region
      _
    $region13: #{distmult_forward.1} parent=1 // pred_fallthru
      _
    %v16 = vld [vmem:[%s0] sm:$0xff]
    %v17 = vld [vmem:[%s0 + $0x8] sm:$0xff]
    %v18 = vld [vmem:[%s1] sm:$0xff]
    %v19 = vld [vmem:[%s1 + $0x8] sm:$0xff]
    %v20 = vmul.f32 %v16, %v18
    %v21 = vmul.f32 %v17, %v19
    %v22 = vpack.c.bf16 %v20, %v20
    %v23 = vpack.c.bf16 %v21, %v21
    %v24 = vld [vmem:[%s2] sm:$0xf]
    %v25 = vld [vmem:[%s2 + $0x4] sm:$0xf]
    %v26 = vld [vmem:[%s2 + $0x8] sm:$0xf]
    %v27 = vld [vmem:[%s2 + $0xc] sm:$0xf]
    %v28 = vld [vmem:[%s2 + $0x10] sm:$0xf]
    %v29 = vld [vmem:[%s2 + $0x14] sm:$0xf]
    %v30 = vld [vmem:[%s2 + $0x18] sm:$0xf]
    %v31 = vld [vmem:[%s2 + $0x1c] sm:$0xf]
    %v32 = vld [vmem:[%s2 + $0x20] sm:$0xf]
    %v33 = vld [vmem:[%s2 + $0x24] sm:$0xf]
    %v34 = vld [vmem:[%s2 + $0x28] sm:$0xf]
    %v35 = vld [vmem:[%s2 + $0x2c] sm:$0xf]
    %v36 = vld [vmem:[%s2 + $0x30] sm:$0xf]
    %v37 = vld [vmem:[%s2 + $0x34] sm:$0xf]
    %v38 = vld [vmem:[%s2 + $0x38] sm:$0xf]
    %v39 = vld [vmem:[%s2 + $0x3c] sm:$0xf]
    %v40 = vld [vmem:[%s2 + $0x40] sm:$0xf]
    %v41 = vld [vmem:[%s2 + $0x44] sm:$0xf]
    %v42 = vld [vmem:[%s2 + $0x48] sm:$0xf]
    %v43 = vld [vmem:[%s2 + $0x4c] sm:$0xf]
    %v44 = vld [vmem:[%s2 + $0x50] sm:$0xf]
    %v45 = vld [vmem:[%s2 + $0x54] sm:$0xf]
    %v46 = vld [vmem:[%s2 + $0x58] sm:$0xf]
    %v47 = vld [vmem:[%s2 + $0x5c] sm:$0xf]
    %v48 = vld [vmem:[%s2 + $0x60] sm:$0xf]
    %v49 = vld [vmem:[%s2 + $0x64] sm:$0xf]
    %v50 = vld [vmem:[%s2 + $0x68] sm:$0xf]
    %v51 = vld [vmem:[%s2 + $0x6c] sm:$0xf]
    %v52 = vld [vmem:[%s2 + $0x70] sm:$0xf]
    %v53 = vld [vmem:[%s2 + $0x74] sm:$0xf]
    %v54 = vld [vmem:[%s2 + $0x78] sm:$0xf]
    %v55 = vld [vmem:[%s2 + $0x7c] sm:$0xf]
    %v88 = vunpack.c.l.b16 %v24
    %v89 = vunpack.c.l.b16 %v25
    %v90 = vunpack.c.l.b16 %v26
    %v91 = vunpack.c.l.b16 %v27
    %v92 = vunpack.c.l.b16 %v28
    %v93 = vunpack.c.l.b16 %v29
    %v94 = vunpack.c.l.b16 %v30
    %v95 = vunpack.c.l.b16 %v31
    %v96 = vunpack.c.l.b16 %v32
    %v97 = vunpack.c.l.b16 %v33
    %v98 = vunpack.c.l.b16 %v34
    %v99 = vunpack.c.l.b16 %v35
    %v100 = vunpack.c.l.b16 %v36
    %v101 = vunpack.c.l.b16 %v37
    %v102 = vunpack.c.l.b16 %v38
    %v103 = vunpack.c.l.b16 %v39
    %v104 = vunpack.c.l.b16 %v40
    %v105 = vunpack.c.l.b16 %v41
    %v106 = vunpack.c.l.b16 %v42
    %v107 = vunpack.c.l.b16 %v43
    %v108 = vunpack.c.l.b16 %v44
    %v109 = vunpack.c.l.b16 %v45
    %v110 = vunpack.c.l.b16 %v46
    %v111 = vunpack.c.l.b16 %v47
    %v112 = vunpack.c.l.b16 %v48
    %v113 = vunpack.c.l.b16 %v49
    %v114 = vunpack.c.l.b16 %v50
    %v115 = vunpack.c.l.b16 %v51
    %v116 = vunpack.c.l.b16 %v52
    %v117 = vunpack.c.l.b16 %v53
    %v118 = vunpack.c.l.b16 %v54
    %v119 = vunpack.c.l.b16 %v55
    %v120 = vpack.c.b16 %v89, %v88
    %v121 = vpack.c.b16 %v91, %v90
    %v122 = vpack.c.b16 %v93, %v92
    %v123 = vpack.c.b16 %v95, %v94
    %v124 = vpack.c.b16 %v97, %v96
    %v125 = vpack.c.b16 %v99, %v98
    %v126 = vpack.c.b16 %v101, %v100
    %v127 = vpack.c.b16 %v103, %v102
    %v128 = vpack.c.b16 %v105, %v104
    %v129 = vpack.c.b16 %v107, %v106
    %v130 = vpack.c.b16 %v109, %v108
    %v131 = vpack.c.b16 %v111, %v110
    %v132 = vpack.c.b16 %v113, %v112
    %v133 = vpack.c.b16 %v115, %v114
    %v134 = vpack.c.b16 %v117, %v116
    %v135 = vpack.c.b16 %v119, %v118
    %152 = vmatprep.subr.bf16.mxu0 0
    %153 = vmatpush1.bf16.msra.mxu0 %v127
    %154 = vmatprep.subr.bf16.mxu0 0
    %155 = vmatpush1.bf16.msra.mxu0 %v126
    %156 = vmatprep.subr.bf16.mxu0 0
    %157 = vmatpush1.bf16.msra.mxu0 %v125
    %158 = vmatprep.subr.bf16.mxu0 0
    %159 = vmatpush1.bf16.msra.mxu0 %v124
    %160 = vmatprep.subr.bf16.mxu0 0
    %161 = vmatpush1.bf16.msra.mxu0 %v123
    %162 = vmatprep.subr.bf16.mxu0 0
    %163 = vmatpush1.bf16.msra.mxu0 %v122
    %164 = vmatprep.subr.bf16.mxu0 0
    %165 = vmatpush1.bf16.msra.mxu0 %v121
    %166 = vmatprep.subr.bf16.mxu0 0
    %167 = vmatpush1.bf16.msra.mxu0 %v120
    %168 = vmatprep.subr.bf16.mxu0 0
    %169 = vmatpush2.bf16.msra.mxu0 %v135
    %170 = vmatprep.subr.bf16.mxu0 0
    %171 = vmatpush2.bf16.msra.mxu0 %v134
    %172 = vmatprep.subr.bf16.mxu0 0
    %173 = vmatpush2.bf16.msra.mxu0 %v133
    %174 = vmatprep.subr.bf16.mxu0 0
    %175 = vmatpush2.bf16.msra.mxu0 %v132
    %176 = vmatprep.subr.bf16.mxu0 0
    %177 = vmatpush2.bf16.msra.mxu0 %v131
    %178 = vmatprep.subr.bf16.mxu0 0
    %179 = vmatpush2.bf16.msra.mxu0 %v130
    %180 = vmatprep.subr.bf16.mxu0 0
    %181 = vmatpush2.bf16.msra.mxu0 %v129
    %182 = vmatprep.subr.bf16.mxu0 0
    %183 = vmatpush2.bf16.msra.mxu0 %v128
    %184 = vmatprep.mubr.bf16.mxu0 %v23
    %185 = vmatmul.mubr.bf16.gmra.mxu0 %v22
    %v186 = vpop.f32.mrf.mxu0
    %v187 = vadd.f32 0.0, %v186
    %v188 = vpop.f32.mrf.mxu0
    %v189 = vpop.f32.mrf.mxu0
    %v190 = vpop.f32.mrf.mxu0
    %191 = vdwg.mxu0
    %v192 = vsub.f32 0.0, %v187
    %v193 = vmul.f32 %v192, 1.442695
    %v194 = vpow.pop %v193
    %v195 = vadd.f32 %v194, 1.0
    %v196 = vrcp.pop %v195
    %197 = vst [vmem:[#allocation2] sm:$0xff] %v196
    // Predicated region
    $region14: #{distmult_forward.1} parent=1 // pred_check
      _
    $region15: #{distmult_forward.1} parent=1 // pred_check_branch
      %199 = sbr.rel (0) target = $region17
    $region16: #{distmult_forward.1} parent=1 // pred_region
      %s201 = ssub.s32 128, 128
      %202 = vsyncadd [#allocation3], %s201
      %s204 = sshll.u32 [#allocation2], 4
      %s205 = int_to_ptr.vmem [resolvable:$true] %s204
      %207 = dma.vmem_to_hbm [thread:$0]  %s205, 128, %s3, [#allocation3]
    $region17: #{distmult_forward.1} parent=1 // pred_fallthru
      _
    // Predicated region
    $region18: #{distmult_forward.1} parent=1 // pred_check
      _
    $region19: #{distmult_forward.1} parent=1 // pred_check_branch
      %209 = sbr.rel (0) target = $region21
    $region20: #{distmult_forward.1} parent=1 // pred_region
      %210 = dma.done [#allocation3], 128
    $region21: #{distmult_forward.1} parent=1 // pred_fallthru
      _
    %211 = vsyncpa [#allocation3], 1

</llo_original>
